<compile_context>
chip_gen: v5e
topology: v5e:2x2
jax: 0.10.0
libtpu: 0.0.40
codegen_flags: <defaults>
</compile_context>

<pallas_src>
import functools

import jax
import jax.numpy as jnp
from jax.experimental import pallas as pl
from jax.experimental.pallas import tpu as pltpu


def _round_up(x, m):
    return (x + m - 1) // m * m


# ----------------------------------------------------------------------------- kernel
def _down_kernel(x_ref, w_ref, b_ref, o_ref, *, whc, ppad, flat_out):
    # x_ref: (nb, 2, sh2, 3*W*Cin)  rows pre-split by output-row parity (the H half of the
    #                               2x2 pool); kh taps + W reflect pad folded into lanes/weights.
    # w_ref: (3*W*Cin, 2*ppad)      merged banded weight: even-w conv columns at [0:whc],
    #                               odd-w conv columns at [ppad:ppad+whc] (128-aligned split).
    # b_ref: (1, whc)               bias tiled over w' (f32), added after the pool.
    # o_ref: (nb, sh2, whc) or (nb, sh2*whc)   conv + 2x2 maxpool output.
    nb, _, sh2, k = x_ref.shape
    x = x_ref[...].reshape(nb * 2 * sh2, k)                  # tile-aligned merge of leading dims
    # Single MXU matmul per grid step, f32 accumulation.
    acc = jnp.dot(x, w_ref[...], preferred_element_type=jnp.float32)   # (M, 2*ppad)
    acc = acc.reshape(nb, 2, sh2, 2 * ppad)
    hmax = jnp.maximum(acc[:, 0], acc[:, 1])                 # H pool: two contiguous slabs
    pmax = jnp.maximum(hmax[..., :whc], hmax[..., ppad:ppad + whc])    # W pool: even vs odd lanes
    out = pmax + b_ref[...]                                  # bias commutes with max
    if flat_out:
        o_ref[...] = out.reshape(nb, sh2 * whc).astype(o_ref.dtype)    # lane-dense store
    else:
        o_ref[...] = out.astype(o_ref.dtype)


# -------------------------------------------------------------------- parameter maker
def make_down_params(w_oihw, bias, *, W, compute_dtype=jnp.bfloat16):
    """Build the merged banded conv+pool weight and tiled bias row.

    Call once per weight update (hoisted out of the per-step forward).  The kw taps, the
    Cin contraction, the W-direction reflect padding, the 3 kh taps and the even/odd
    pooling parity are all folded into one (3*W*Cin, 2*Ppad) matrix, Ppad = roundup(
    (W/2)*Cout, 128).  Built with scatter-adds (O(9 * W/2 * Cin * Cout) work).
    """
    cout, cin, kh_, kw_ = w_oihw.shape
    assert kh_ == 3 and kw_ == 3, "down uses a 3x3 conv"
    assert W % 2 == 0
    wh = W // 2
    whc = wh * cout
    ppad = _round_up(whc, 128)

    wt = jnp.transpose(w_oihw, (2, 3, 1, 0)).astype(jnp.float32)       # (kh, kw, ci, co)
    wfull = jnp.zeros((3, W, cin, 2, wh, cout), jnp.float32)
    wp = jnp.arange(wh)
    for kh in range(3):
        for kw in range(3):
            for par in range(2):
                j = 2 * wp + par - 1 + kw                    # input column in padded coords
                j = jnp.where(j < 0, -j, j)                  # reflect left  (PyTorch 'reflect')
                j = jnp.where(j > W - 1, 2 * (W - 1) - j, j) # reflect right
                wfull = wfull.at[kh, j, :, par, wp, :].add(wt[kh, kw])
    wcols = wfull.reshape(3 * W * cin, 2, whc)
    if ppad > whc:
        wcols = jnp.pad(wcols, ((0, 0), (0, 0), (0, ppad - whc)))
    wbig = wcols.reshape(3 * W * cin, 2 * ppad).astype(compute_dtype)
    bias_row = jnp.tile(bias.astype(jnp.float32), (wh,)).reshape(1, whc)
    return wbig, bias_row


# --------------------------------------------------------------------------- helpers
def _vmem_limit_bytes():
    cap = 64 * 1024 * 1024
    try:
        cap = int(pltpu.get_tpu_info().vmem_capacity_bytes)
    except Exception:
        pass
    # ~40 MiB on v7x (64 MiB physical), ~80 MiB on v5e/v6e (128 MiB), capped at 96 MiB.
    return int(min(cap * 5 // 8, 96 * 1024 * 1024))


def _const_input_spec(block_shape, index_map):
    # Grid-invariant input: single-buffer it (default double-buffering wastes VMEM since
    # the block never changes across the grid).
    try:
        return pl.BlockSpec(block_shape, index_map, pipeline_mode=pl.Buffered(1))
    except Exception:
        return pl.BlockSpec(block_shape, index_map)


def _choose_blocks(*, N, H, K, whc, ppad, in_bytes, out_bytes, budget, flat_out,
                   images_per_step, rows_per_step):
    hh = H // 2

    def strip_ok(sh):
        if sh <= 0 or sh % 2 or H % sh:
            return False
        sh2 = sh // 2
        if sh2 % 8 and sh2 != hh:          # tile-aligned sublane blocks / (8,128) rule
            return False
        if flat_out and H // sh > 1 and (sh2 * whc) % 128:
            return False
        return True

    def nb_ok(nb):
        if nb <= 0 or N % nb:
            return False
        if flat_out and nb != N and nb % 8:  # (8,128) rule on the flattened output block
            return False
        return True

    def footprint(nb, sh):
        sh2 = sh // 2
        x_blk = 2 * nb * 2 * sh2 * K * in_bytes            # double-buffered input
        o_blk = 2 * nb * sh2 * whc * out_bytes             # double-buffered output
        w_res = K * 2 * ppad * in_bytes                    # single-buffered weights
        interm = 2 * nb * 2 * sh2 * 2 * ppad * 4           # f32 matmul / pool temporaries
        return x_blk + o_blk + w_res + interm + (2 << 20)

    if rows_per_step is not None and not strip_ok(rows_per_step):
        raise ValueError(f"invalid rows_per_step={rows_per_step} for H={H}")
    if images_per_step is not None and not nb_ok(images_per_step):
        raise ValueError(f"invalid images_per_step={images_per_step} for N={N}")

    strips = ([rows_per_step] if rows_per_step is not None
              else [s for s in range(H, 0, -1) if strip_ok(s)])
    nbs = ([images_per_step] if images_per_step is not None
           else [n for n in range(N, 0, -1) if nb_ok(n)])

    best = None
    for sh in strips:
        for nb in nbs:
            if footprint(nb, sh) <= budget:
                cand = (nb * sh, sh, nb)
                if best is None or cand > best:
                    best = cand
    if best is None:                                        # best effort: smallest tile
        return nbs[-1], strips[-1]
    return best[2], best[1]


# --------------------------------------------------------------------------- forward
def down_apply(x_nchw, wbig, bias_row, *, images_per_step=None, rows_per_step=None,
               vmem_limit_bytes=None):
    """Forward of `down`: reflect-pad 3x3 conv (c -> 2c) + MaxPool2d(2).

    x_nchw:   (N, Cin, H, W)
    wbig:     (3*W*Cin, 2*Ppad) merged weight from make_down_params (its dtype is the MXU
              compute dtype: bf16 for the fast path, f32 for verification)
    bias_row: (1, (W/2)*Cout) f32 from make_down_params
    returns   (N, Cout, H/2, W/2) in x_nchw.dtype
    """
    N, cin, H, W = x_nchw.shape
    assert H % 2 == 0 and W % 2 == 0 and H >= 2 and W >= 2, "even H/W required"
    hh, wh = H // 2, W // 2
    whc = bias_row.shape[1]
    cout = whc // wh
    assert whc == wh * cout
    ppad = _round_up(whc, 128)
    K = 3 * W * cin
    assert wbig.shape == (K, 2 * ppad), (wbig.shape, (K, 2 * ppad))

    compute_dtype = wbig.dtype
    in_bytes = jnp.dtype(compute_dtype).itemsize
    out_dtype = x_nchw.dtype
    out_bytes = jnp.dtype(out_dtype).itemsize
    flat_out = (whc % 128) != 0

    if vmem_limit_bytes is None:
        vmem_limit_bytes = _vmem_limit_bytes()
    nb, strip = _choose_blocks(
        N=N, H=H, K=K, whc=whc, ppad=ppad, in_bytes=in_bytes, out_bytes=out_bytes,
        budget=(vmem_limit_bytes * 3) // 4, flat_out=flat_out,
        images_per_step=images_per_step, rows_per_step=rows_per_step)
    sh2 = strip // 2
    grid = (N // nb, H // strip)

    # Wrapper-side layout plumbing (plain XLA): NCHW -> lane-dense rows, 3 kh taps folded
    # into lanes (makes H strips halo-free), rows pre-split by output-row parity.
    xr = jnp.transpose(x_nchw, (0, 2, 3, 1)).reshape(N, H, W * cin)            # (N,H,W*Cin)
    xh = jnp.pad(xr, ((0, 0), (1, 1), (0, 0)), mode="reflect")                 # H reflect pad
    xcat = jnp.concatenate([xh[:, 0:H], xh[:, 1:H + 1], xh[:, 2:H + 2]], axis=-1)  # (N,H,3WC)
    xpar = xcat.reshape(N, hh, 2, K).transpose(0, 2, 1, 3).astype(compute_dtype)   # (N,2,hh,K)

    kernel = functools.partial(_down_kernel, whc=whc, ppad=ppad, flat_out=flat_out)

    in_specs = [
        pl.BlockSpec((nb, 2, sh2, K), lambda n, s: (n, 0, s, 0)),
        _const_input_spec((K, 2 * ppad), lambda n, s: (0, 0)),
        _const_input_spec((1, whc), lambda n, s: (0, 0)),
    ]
    if flat_out:
        out_shape = jax.ShapeDtypeStruct((N, hh * whc), out_dtype)
        out_specs = pl.BlockSpec((nb, sh2 * whc), lambda n, s: (n, s))
    else:
        out_shape = jax.ShapeDtypeStruct((N, hh, whc), out_dtype)
        out_specs = pl.BlockSpec((nb, sh2, whc), lambda n, s: (n, s, 0))

    out = pl.pallas_call(
        kernel,
        out_shape=out_shape,
        grid_spec=pltpu.PrefetchScalarGridSpec(
            num_scalar_prefetch=0,
            grid=grid,
            in_specs=in_specs,
            out_specs=out_specs,
        ),
        compiler_params=pltpu.CompilerParams(
            dimension_semantics=("parallel", "parallel"),
            vmem_limit_bytes=int(vmem_limit_bytes),
        ),
    )(xpar, wbig, bias_row)

    # lane-dense output -> NCHW
    return jnp.transpose(out.reshape(N, hh, wh, cout), (0, 3, 1, 2))


# -------------------------------------------------------------------------- reference
def down_reference(x_nchw, w_oihw, bias):
    x = jnp.pad(x_nchw, ((0, 0), (0, 0), (1, 1), (1, 1)), mode="reflect")
    y = jax.lax.conv_general_dilated(
        x, w_oihw, window_strides=(1, 1), padding="VALID",
        dimension_numbers=("NCHW", "OIHW", "NCHW"))
    y = y + bias.reshape(1, -1, 1, 1)
    return jax.lax.reduce_window(y, -jnp.inf, jax.lax.max,
                                 (1, 1, 2, 2), (1, 1, 2, 2), "VALID")


if __name__ == "__main__":
    key = jax.random.PRNGKey(0)
    k_x, k_w, k_b, k_x2 = jax.random.split(key, 4)

    # down(c=4): 4 -> 8 channels, 16x16 -> 8x8
    N, C, H, W = 2, 4, 16, 16
    Cout = 2 * C
    x = jax.random.normal(k_x, (N, C, H, W), dtype=jnp.float32)
    w = jax.random.normal(k_w, (Cout, C, 3, 3), dtype=jnp.float32) * 0.1
    b = jax.random.normal(k_b, (Cout,), dtype=jnp.float32) * 0.1

    fwd = jax.jit(down_apply,
                  static_argnames=("images_per_step", "rows_per_step", "vmem_limit_bytes"))
    ref = down_reference(x, w, b)

    # f32 compute path: tight check against the XLA reference.
    wbig32, brow = make_down_params(w, b, W=W, compute_dtype=jnp.float32)
    out_f32 = fwd(x, wbig32, brow)
    jax.block_until_ready(out_f32)
    assert out_f32.shape == (N, Cout, H // 2, W // 2), out_f32.shape
    assert jnp.allclose(out_f32, ref, atol=1e-4, rtol=1e-4), "f32 mismatch vs reference"

    # bf16-matmul / f32-accumulate path (the perf path on v6e/v7x).
    wbig16, brow16 = make_down_params(w, b, W=W, compute_dtype=jnp.bfloat16)
    out_bf16 = fwd(x, wbig16, brow16)
    jax.block_until_ready(out_bf16)
    assert out_bf16.shape == (N, Cout, H // 2, W // 2), out_bf16.shape
    assert jnp.allclose(out_bf16, ref, atol=5e-2, rtol=5e-2), "bf16 mismatch vs reference"

    # Larger spatial case exercising the H-strip grid axis (grid = (2, 2)) and the
    # non-flattened (Wh*Cout % 128 == 0) output store path.
    H2 = W2 = 32
    x2 = jax.random.normal(k_x2, (N, C, H2, W2), dtype=jnp.float32)
    ref2 = down_reference(x2, w, b)
    wbig2, brow2 = make_down_params(w, b, W=W2, compute_dtype=jnp.float32)
    out2 = fwd(x2, wbig2, brow2, images_per_step=1, rows_per_step=16)
    jax.block_until_ready(out2)
    assert out2.shape == (N, Cout, H2 // 2, W2 // 2), out2.shape
    assert jnp.allclose(out2, ref2, atol=1e-4, rtol=1e-4), "strip-path mismatch vs reference"

    print("KERNEL_OK")
</pallas_src>

<mosaic_0001>
module attributes {stable_mosaic.version = 11 : i64} {
  func.func @_down_kernel(%arg0: i32, %arg1: i32, %arg2: memref<2x2x8x192xf32, #tpu.memory_space<vmem>>, %arg3: memref<192x256xf32, #tpu.memory_space<vmem>>, %arg4: memref<1x64xf32, #tpu.memory_space<vmem>>, %arg5: memref<2x512xf32, #tpu.memory_space<vmem>>) attributes {dimension_semantics = [#tpu.dimension_semantics<parallel>, #tpu.dimension_semantics<parallel>], iteration_bounds = array<i64: 1, 1>, scalar_prefetch = 0 : i64, scratch_operands = 0 : i64, tpu.core_type = #tpu.core_type<tc>, window_params = [{transform_indices = @transform_0, window_bounds = array<i64: 2, 2, 8, 192>}, {pipeline_mode = #tpu.pipeline_mode<synchronous>, transform_indices = @transform_1, window_bounds = array<i64: 192, 256>}, {pipeline_mode = #tpu.pipeline_mode<synchronous>, transform_indices = @transform_2, window_bounds = array<i64: 1, 64>}, {transform_indices = @transform_3, window_bounds = array<i64: 2, 512>}]} {
    %c0 = arith.constant 0 : index
    %c0_0 = arith.constant 0 : index
    %c0_1 = arith.constant 0 : index
    %c0_2 = arith.constant 0 : index
    %0 = vector.load %arg2[%c0, %c0_0, %c0_1, %c0_2] : memref<2x2x8x192xf32, #tpu.memory_space<vmem>>, vector<2x2x8x192xf32>
    %1 = vector.shape_cast %0 : vector<2x2x8x192xf32> to vector<32x192xf32>
    %c0_3 = arith.constant 0 : index
    %c0_4 = arith.constant 0 : index
    %2 = vector.load %arg3[%c0_3, %c0_4] : memref<192x256xf32, #tpu.memory_space<vmem>>, vector<192x256xf32>
    %cst = arith.constant dense<0.000000e+00> : vector<32x256xf32>
    %3 = tpu.matmul %1, %2, %cst {dimension_numbers = #tpu.dot_dimension_numbers<[1], [0], [0], [1], [0, 0, 1, 1], [], []>} : vector<32x192xf32>, vector<192x256xf32>, vector<32x256xf32> -> vector<32x256xf32>
    %4 = vector.shape_cast %3 : vector<32x256xf32> to vector<2x2x8x256xf32>
    %5 = vector.extract_strided_slice %4 {offsets = [0, 0, 0, 0], sizes = [2, 1, 8, 256], strides = [1, 1, 1, 1]} : vector<2x2x8x256xf32> to vector<2x1x8x256xf32>
    %6 = vector.shape_cast %5 : vector<2x1x8x256xf32> to vector<2x8x256xf32>
    %7 = vector.extract_strided_slice %4 {offsets = [0, 1, 0, 0], sizes = [2, 1, 8, 256], strides = [1, 1, 1, 1]} : vector<2x2x8x256xf32> to vector<2x1x8x256xf32>
    %8 = vector.shape_cast %7 : vector<2x1x8x256xf32> to vector<2x8x256xf32>
    %9 = arith.maximumf %6, %8 : vector<2x8x256xf32>
    %10 = vector.extract_strided_slice %9 {offsets = [0, 0, 0], sizes = [2, 8, 64], strides = [1, 1, 1]} : vector<2x8x256xf32> to vector<2x8x64xf32>
    %11 = vector.extract_strided_slice %9 {offsets = [0, 0, 128], sizes = [2, 8, 64], strides = [1, 1, 1]} : vector<2x8x256xf32> to vector<2x8x64xf32>
    %12 = arith.maximumf %10, %11 : vector<2x8x64xf32>
    %c0_5 = arith.constant 0 : index
    %c0_6 = arith.constant 0 : index
    %13 = vector.load %arg4[%c0_5, %c0_6] : memref<1x64xf32, #tpu.memory_space<vmem>>, vector<1x64xf32>
    %14 = vector.shape_cast %13 : vector<1x64xf32> to vector<1x1x64xf32>
    %15 = vector.broadcast %14 : vector<1x1x64xf32> to vector<2x8x64xf32>
    %16 = arith.addf %12, %15 : vector<2x8x64xf32>
    %17 = vector.shape_cast %16 : vector<2x8x64xf32> to vector<2x512xf32>
    %c0_7 = arith.constant 0 : index
    %c0_8 = arith.constant 0 : index
    %18 = vector.load %arg5[%c0_7, %c0_8] : memref<2x512xf32, #tpu.memory_space<vmem>>, vector<2x512xf32>
    tpu.vector_store %arg5[%c0_7, %c0_8], %17 {strides = array<i32>} : memref<2x512xf32, #tpu.memory_space<vmem>>, vector<2x512xf32>,
    return
  }
  func.func @transform_0(%arg0: i32, %arg1: i32) -> (i32, i32, i32, i32) {
    %c0_i32 = arith.constant 0 : i32
    %c0_i32_0 = arith.constant 0 : i32
    %c0_i32_1 = arith.constant 0 : i32
    return %arg0, %c0_i32, %arg1, %c0_i32_0 : i32, i32, i32, i32
  }
  func.func @transform_1(%arg0: i32, %arg1: i32) -> (i32, i32) {
    %c0_i32 = arith.constant 0 : i32
    %c0_i32_0 = arith.constant 0 : i32
    %c0_i32_1 = arith.constant 0 : i32
    return %c0_i32, %c0_i32_0 : i32, i32
  }
  func.func @transform_2(%arg0: i32, %arg1: i32) -> (i32, i32) {
    %c0_i32 = arith.constant 0 : i32
    %c0_i32_0 = arith.constant 0 : i32
    %c0_i32_1 = arith.constant 0 : i32
    return %c0_i32, %c0_i32_0 : i32, i32
  }
  func.func @transform_3(%arg0: i32, %arg1: i32) -> (i32, i32) {
    %c0_i32 = arith.constant 0 : i32
    return %arg0, %arg1 : i32, i32
  }
}

</mosaic_0001>

<llo_original>
// kernel: down_apply.1
$region0: #{down_apply.1}
  #allocation0 [shape = 'u32[]', space=smem, size = 0x4, offset = 0x4, fixed_abs, tag = 'smem constant byte address 0x4 - core index']
  #allocation1 [shape = 'u32[72,128]{1,0:T(1,128)}', space=vmem, size = 0x9000, scoped, tag = 'internal scratch']
  %s0 = inlined_call_operand.vmem [shape: f32[2,2,8,192], index: 0, kind: input, shape index: {}]
  %s1 = inlined_call_operand.vmem [shape: f32[192,256], index: 1, kind: input, shape index: {}]
  %s2 = inlined_call_operand.vmem [shape: f32[1,64], index: 2, kind: input, shape index: {}]
  %s3 = inlined_call_operand.vmem [shape: f32[2,512], index: 3, kind: output, shape index: {}]
  %s4 = sld [smem:[#allocation0]]
  $region22: #{down_apply.1} parent=0
    _
  %s6 = ssub.s32 1, %s4
  %s7 = scalar_select 0, %s6, %s4
  // Predicated region
  $region2: #{down_apply.1} parent=0 // pred_check
    _
  $region3: #{down_apply.1} parent=0 // pred_check_branch
    %9 = sbr.rel (0) target = $region5
  $region4: #{down_apply.1} parent=0 // pred_region
    _
  $region5: #{down_apply.1} parent=0 // pred_fallthru
    _
  // Predicated region
  $region6: #{down_apply.1} parent=0 // pred_check
    _
  $region7: #{down_apply.1} parent=0 // pred_check_branch
    %11 = sbr.rel (0) target = $region9
  $region8: #{down_apply.1} parent=0 // pred_region
    _
  $region9: #{down_apply.1} parent=0 // pred_fallthru
    _
  // Predicated region
  $region10: #{down_apply.1} parent=0 // pred_check
    _
  $region11: #{down_apply.1} parent=0 // pred_check_branch
    %13 = sbr.rel (0) target = $region13
  $region12: #{down_apply.1} parent=0 // pred_region
    _
  $region13: #{down_apply.1} parent=0 // pred_fallthru
    _
  %v14 = vld [vmem:[%s0] sm:$0xff]
  %v15 = vld [vmem:[%s0 + $0x8] sm:$0xff]
  %v16 = vld [vmem:[%s0 + $0x10] sm:$0xff]
  %v17 = vld [vmem:[%s0 + $0x18] sm:$0xff]
  %v18 = vld [vmem:[%s0 + $0x20] sm:$0xff]
  %v19 = vld [vmem:[%s0 + $0x28] sm:$0xff]
  %v20 = vld [vmem:[%s0 + $0x30] sm:$0xff]
  %v21 = vld [vmem:[%s0 + $0x38] sm:$0xff]
  %v22 = vld [vmem:[%s1] sm:$0xff]
  %v23 = vld [vmem:[%s1 + $0x8] sm:$0xff]
  %v24 = vld [vmem:[%s1 + $0x10] sm:$0xff]
  %v25 = vld [vmem:[%s1 + $0x18] sm:$0xff]
  %v26 = vld [vmem:[%s1 + $0x20] sm:$0xff]
  %v27 = vld [vmem:[%s1 + $0x28] sm:$0xff]
  %v28 = vld [vmem:[%s1 + $0x30] sm:$0xff]
  %v29 = vld [vmem:[%s1 + $0x38] sm:$0xff]
  %v30 = vld [vmem:[%s1 + $0x40] sm:$0xff]
  %v31 = vld [vmem:[%s1 + $0x48] sm:$0xff]
  %v32 = vld [vmem:[%s1 + $0x50] sm:$0xff]
  %v33 = vld [vmem:[%s1 + $0x58] sm:$0xff]
  %v34 = vld [vmem:[%s1 + $0x60] sm:$0xff]
  %v35 = vld [vmem:[%s1 + $0x68] sm:$0xff]
  %v36 = vld [vmem:[%s1 + $0x70] sm:$0xff]
  %v37 = vld [vmem:[%s1 + $0x78] sm:$0xff]
  %v38 = vld [vmem:[%s1 + $0x80] sm:$0xff]
  %v39 = vld [vmem:[%s1 + $0x88] sm:$0xff]
  %v40 = vld [vmem:[%s1 + $0x90] sm:$0xff]
  %v41 = vld [vmem:[%s1 + $0x98] sm:$0xff]
  %v42 = vld [vmem:[%s1 + $0xa0] sm:$0xff]
  %v43 = vld [vmem:[%s1 + $0xa8] sm:$0xff]
  %v44 = vld [vmem:[%s1 + $0xb0] sm:$0xff]
  %v45 = vld [vmem:[%s1 + $0xb8] sm:$0xff]
  %v46 = vld [vmem:[%s1 + $0xc0] sm:$0xff]
  %v47 = vld [vmem:[%s1 + $0xc8] sm:$0xff]
  %v48 = vld [vmem:[%s1 + $0xd0] sm:$0xff]
  %v49 = vld [vmem:[%s1 + $0xd8] sm:$0xff]
  %v50 = vld [vmem:[%s1 + $0xe0] sm:$0xff]
  %v51 = vld [vmem:[%s1 + $0xe8] sm:$0xff]
  %v52 = vld [vmem:[%s1 + $0xf0] sm:$0xff]
  %v53 = vld [vmem:[%s1 + $0xf8] sm:$0xff]
  %v54 = vld [vmem:[%s1 + $0x100] sm:$0xff]
  %v55 = vld [vmem:[%s1 + $0x108] sm:$0xff]
  %v56 = vld [vmem:[%s1 + $0x110] sm:$0xff]
  %v57 = vld [vmem:[%s1 + $0x118] sm:$0xff]
  %v58 = vld [vmem:[%s1 + $0x120] sm:$0xff]
  %v59 = vld [vmem:[%s1 + $0x128] sm:$0xff]
  %v60 = vld [vmem:[%s1 + $0x130] sm:$0xff]
  %v61 = vld [vmem:[%s1 + $0x138] sm:$0xff]
  %v62 = vld [vmem:[%s1 + $0x140] sm:$0xff]
  %v63 = vld [vmem:[%s1 + $0x148] sm:$0xff]
  %v64 = vld [vmem:[%s1 + $0x150] sm:$0xff]
  %v65 = vld [vmem:[%s1 + $0x158] sm:$0xff]
  %v66 = vld [vmem:[%s1 + $0x160] sm:$0xff]
  %v67 = vld [vmem:[%s1 + $0x168] sm:$0xff]
  %v68 = vld [vmem:[%s1 + $0x170] sm:$0xff]
  %v69 = vld [vmem:[%s1 + $0x178] sm:$0xff]
  %vm70 = vcmask 523264
  %v72 = vsel %vm70, %v15, 0
  %v75 = vsel %vm70, %v17, 0
  %v78 = vsel %vm70, %v19, 0
  %v81 = vsel %vm70, %v21, 0
  %83 = vmatpush.msra.mxu0 %v52
  %84 = vmatpush.msra.mxu0 %v50
  %85 = vmatpush.msra.mxu0 %v48
  %86 = vmatpush.msra.mxu0 %v46
  %87 = vmatpush.msra.mxu0 %v44
  %88 = vmatpush.msra.mxu0 %v42
  %89 = vmatpush.msra.mxu0 %v40
  %90 = vmatpush.msra.mxu0 %v38
  %91 = vmatpush.msra.mxu0 %v36
  %92 = vmatpush.msra.mxu0 %v34
  %93 = vmatpush.msra.mxu0 %v32
  %94 = vmatpush.msra.mxu0 %v30
  %95 = vmatpush.msra.mxu0 %v28
  %96 = vmatpush.msra.mxu0 %v26
  %97 = vmatpush.msra.mxu0 %v24
  %98 = vmatpush.msra.mxu0 %v22
  %99 = vmatmul.f32.gmra.mxu0 %v14
  %v100 = vpop.f32.mrf.mxu0
  %v101 = vadd.f32 0.0, %v100
  %102 = vmatmul.f32.gmra.mxu0 %v16
  %v103 = vpop.f32.mrf.mxu0
  %v104 = vadd.f32 0.0, %v103
  %105 = vmatmul.f32.gmra.mxu0 %v18
  %v106 = vpop.f32.mrf.mxu0
  %v107 = vadd.f32 0.0, %v106
  %108 = vmatmul.f32.gmra.mxu0 %v20
  %v109 = vpop.f32.mrf.mxu0
  %v110 = vadd.f32 0.0, %v109
  %111 = vdwg.mxu0
  %112 = vmatpush.msra.mxu0 0.0
  %113 = vmatpush.msra.mxu0 0.0
  %114 = vmatpush.msra.mxu0 0.0
  %115 = vmatpush.msra.mxu0 0.0
  %116 = vmatpush.msra.mxu0 0.0
  %117 = vmatpush.msra.mxu0 0.0
  %118 = vmatpush.msra.mxu0 0.0
  %119 = vmatpush.msra.mxu0 0.0
  %120 = vmatpush.msra.mxu0 %v68
  %121 = vmatpush.msra.mxu0 %v66
  %122 = vmatpush.msra.mxu0 %v64
  %123 = vmatpush.msra.mxu0 %v62
  %124 = vmatpush.msra.mxu0 %v60
  %125 = vmatpush.msra.mxu0 %v58
  %126 = vmatpush.msra.mxu0 %v56
  %127 = vmatpush.msra.mxu0 %v54
  %128 = vmatmul.f32.gmra.mxu0 %v72
  %v129 = vpop.f32.mrf.mxu0
  %v130 = vadd.f32 %v101, %v129
  %131 = vmatmul.f32.gmra.mxu0 %v75
  %v132 = vpop.f32.mrf.mxu0
  %v133 = vadd.f32 %v104, %v132
  %134 = vmatmul.f32.gmra.mxu0 %v78
  %v135 = vpop.f32.mrf.mxu0
  %v136 = vadd.f32 %v107, %v135
  %137 = vmatmul.f32.gmra.mxu0 %v81
  %v138 = vpop.f32.mrf.mxu0
  %v139 = vadd.f32 %v110, %v138
  %140 = vdwg.mxu0
  %141 = vmatpush.msra.mxu0 %v53
  %142 = vmatpush.msra.mxu0 %v51
  %143 = vmatpush.msra.mxu0 %v49
  %144 = vmatpush.msra.mxu0 %v47
  %145 = vmatpush.msra.mxu0 %v45
  %146 = vmatpush.msra.mxu0 %v43
  %147 = vmatpush.msra.mxu0 %v41
  %148 = vmatpush.msra.mxu0 %v39
  %149 = vmatpush.msra.mxu0 %v37
  %150 = vmatpush.msra.mxu0 %v35
  %151 = vmatpush.msra.mxu0 %v33
  %152 = vmatpush.msra.mxu0 %v31
  %153 = vmatpush.msra.mxu0 %v29
  %154 = vmatpush.msra.mxu0 %v27
  %155 = vmatpush.msra.mxu0 %v25
  %156 = vmatpush.msra.mxu0 %v23
  %157 = vmatmul.f32.gmra.mxu0 %v14
  %v158 = vpop.f32.mrf.mxu0
  %v159 = vadd.f32 0.0, %v158
  %160 = vmatmul.f32.gmra.mxu0 %v16
  %v161 = vpop.f32.mrf.mxu0
  %v162 = vadd.f32 0.0, %v161
  %163 = vmatmul.f32.gmra.mxu0 %v18
  %v164 = vpop.f32.mrf.mxu0
  %v165 = vadd.f32 0.0, %v164
  %166 = vmatmul.f32.gmra.mxu0 %v20
  %v167 = vpop.f32.mrf.mxu0
  %v168 = vadd.f32 0.0, %v167
  %169 = vdwg.mxu0
  %170 = vmatpush.msra.mxu0 0.0
  %171 = vmatpush.msra.mxu0 0.0
  %172 = vmatpush.msra.mxu0 0.0
  %173 = vmatpush.msra.mxu0 0.0
  %174 = vmatpush.msra.mxu0 0.0
  %175 = vmatpush.msra.mxu0 0.0
  %176 = vmatpush.msra.mxu0 0.0
  %177 = vmatpush.msra.mxu0 0.0
  %178 = vmatpush.msra.mxu0 %v69
  %179 = vmatpush.msra.mxu0 %v67
  %180 = vmatpush.msra.mxu0 %v65
  %181 = vmatpush.msra.mxu0 %v63
  %182 = vmatpush.msra.mxu0 %v61
  %183 = vmatpush.msra.mxu0 %v59
  %184 = vmatpush.msra.mxu0 %v57
  %185 = vmatpush.msra.mxu0 %v55
  %186 = vmatmul.f32.gmra.mxu0 %v72
  %v187 = vpop.f32.mrf.mxu0
  %v188 = vadd.f32 %v159, %v187
  %189 = vmatmul.f32.gmra.mxu0 %v75
  %v190 = vpop.f32.mrf.mxu0
  %v191 = vadd.f32 %v162, %v190
  %192 = vmatmul.f32.gmra.mxu0 %v78
  %v193 = vpop.f32.mrf.mxu0
  %v194 = vadd.f32 %v165, %v193
  %195 = vmatmul.f32.gmra.mxu0 %v81
  %v196 = vpop.f32.mrf.mxu0
  %v197 = vadd.f32 %v168, %v196
  %198 = vdwg.mxu0
  %v199 = vmax.f32 %v130, %v133
  %v200 = vmax.f32 %v188, %v191
  %v201 = vmax.f32 %v136, %v139
  %v202 = vmax.f32 %v194, %v197
  %v203 = vmax.f32 %v199, %v200
  %v204 = vmax.f32 %v201, %v202
  %v205 = vld [vmem:[%s2] sm:$0x1]
  %v207 = vperm.slane %v205, 0
  %v209 = vadd.f32 %v203, %v207
  %v210 = vadd.f32 %v204, %v207
  %v211 = vrot.slane %v209, 4
  %vm212 = vcmask 1047556
  %v213 = vsel %vm212, 0.0, %v211
  %v215 = vunpack.c.l.s4 1983009808
  %v216 = vunpack.c.0.s8 %v215
  %v217 = vperm.slane %v209, %v216
  %v219 = vunpack.c.l.s4 1983009808
  %v220 = vunpack.c.0.s8 %v219
  %v221 = vperm.slane %v213, %v220
  %v222 = vrot.slane %v210, 4
  %v223 = vsel %vm212, 0.0, %v222
  %v225 = vunpack.c.l.s4 1983009808
  %v226 = vunpack.c.0.s8 %v225
  %v227 = vperm.slane %v210, %v226
  %v229 = vunpack.c.l.s4 1983009808
  %v230 = vunpack.c.0.s8 %v229
  %v231 = vperm.slane %v223, %v230
  %v232 = vrot.slane %v227, 4
  %v233 = vsel %vm212, %v232, %v217
  %v234 = vrot.slane %v217, 4
  %v235 = vsel %vm212, %v227, %v234
  %v237 = vunpack.c.l.s4 1934713408
  %v238 = vunpack.c.0.s8 %v237
  %v239 = vperm.slane %v233, %v238
  %v241 = vunpack.c.l.s4 1934713408
  %v242 = vunpack.c.0.s8 %v241
  %v243 = vperm.slane %v235, %v242
  %v244 = vrot.slane %v231, 4
  %v245 = vsel %vm212, %v244, %v221
  %v246 = vrot.slane %v221, 4
  %v247 = vsel %vm212, %v231, %v246
  %v249 = vunpack.c.l.s4 1934713408
  %v250 = vunpack.c.0.s8 %v249
  %v251 = vperm.slane %v245, %v250
  %v253 = vunpack.c.l.s4 1934713408
  %v254 = vunpack.c.0.s8 %v253
  %v255 = vperm.slane %v247, %v254
  %v256 = vrot.slane %v239, 4
  %v257 = vsel %vm212, 0.0, %v256
  %v258 = vrot.slane %v243, 4
  %v259 = vsel %vm212, 0.0, %v258
  %v260 = vrot.slane %v251, 4
  %v261 = vsel %vm212, 0.0, %v260
  %v262 = vrot.slane %v255, 4
  %v263 = vsel %vm212, 0.0, %v262
  %265 = vrot.lane.b32.xlu0 %v257, 64
  %v266 = vpop.permute.xlu0 %265
  %269 = vrot.lane.b32.xlu0 %v259, 64
  %v270 = vpop.permute.xlu0 %269
  %273 = vrot.lane.b32.xlu0 %v261, 64
  %v274 = vpop.permute.xlu0 %273
  %277 = vrot.lane.b32.xlu0 %v263, 64
  %v278 = vpop.permute.xlu0 %277
  %v280 = vsel %vm70, %v239, %v266
  %v281 = vsel %vm70, %v243, %v270
  %v282 = vsel %vm70, %v251, %v274
  %v283 = vsel %vm70, %v255, %v278
  %v288 = vrot.slane %v281, 6
  %v289 = vrot.slane %v282, 4
  %v290 = vrot.slane %v283, 2
  %vm291 = vcmask 1041408
  %v292 = vsel %vm291, %v280, %v288
  %vm293 = vcmask 1045508
  %v294 = vsel %vm293, %v289, %v290
  %vm295 = vcmask 1043456
  %v296 = vsel %vm295, %v292, %v294
  %298 = vst [vmem:[%s3] sm:$0xff] %v296
  // Predicated region
  $region14: #{down_apply.1} parent=0 // pred_check
    _
  $region15: #{down_apply.1} parent=0 // pred_check_branch
    %300 = sbr.rel (0) target = $region17
  $region16: #{down_apply.1} parent=0 // pred_region
    _
  $region17: #{down_apply.1} parent=0 // pred_fallthru
    _
  // Predicated region
  $region18: #{down_apply.1} parent=0 // pred_check
    _
  $region19: #{down_apply.1} parent=0 // pred_check_branch
    %302 = sbr.rel (0) target = $region21
  $region20: #{down_apply.1} parent=0 // pred_region
    _
  $region21: #{down_apply.1} parent=0 // pred_fallthru
    _

</llo_original>
